<compile_context>
chip_gen: v7x
topology: tpu7x:2x2x1
jax: 0.10.0
libtpu: 0.0.40
codegen_flags: <defaults>
</compile_context>

<pallas_src>
import math

import jax
import jax.numpy as jnp
from jax.experimental import pallas as pl
from jax.experimental.pallas import tpu as pltpu

EPS = 1e-5


# ----------------------------- fused Pallas kernel -----------------------------


def _edge_attention_kernel(xT_ref, featT_ref, w1t_ref, gamma_ref, beta_ref,
                           w2t_ref, o_ref):
    # Per grid step (one graph):
    #   xT:    [1, out_n, E]   tensor to be gated (E on the lane axis)
    #   featT: [1, in_n,  E]   attention input
    #   w1t:   [hid, in_n]     layer-1 weight, pre-transposed
    #   gamma, beta: [hid, 1]  BN affine parameters
    #   w2t:   [out_n, hid]    layer-2 weight (no bias), pre-transposed
    #   out:   [1, out_n, E] = xT * hardsigmoid( W2t @ relu(bn(W1t @ featT)) )
    featT = featT_ref[0].astype(w1t_ref.dtype)

    # Linear 1 (MXU). Bias omitted: cancelled exactly by BN mean subtraction.
    h = jnp.dot(w1t_ref[...], featT, preferred_element_type=jnp.float32)  # [hid, E]

    # Training-mode BatchNorm1d over the edge (lane) axis, folded to scale/shift.
    mean = jnp.mean(h, axis=1, keepdims=True)                       # [hid, 1]
    var = jnp.mean((h - mean) * (h - mean), axis=1, keepdims=True)  # biased var
    scale = gamma_ref[...] * jax.lax.rsqrt(var + EPS)               # EUP rsqrt
    shift = beta_ref[...] - mean * scale
    h = jnp.maximum(h * scale + shift, 0.0)                         # BN + ReLU

    # Linear 2 (MXU, no bias).
    f = jnp.dot(w2t_ref[...], h.astype(w2t_ref.dtype),
                preferred_element_type=jnp.float32)                 # [out_n, E]

    # Hardsigmoid: clip(x/6 + 1/2, 0, 1)
    f = jnp.clip(f * (1.0 / 6.0) + 0.5, 0.0, 1.0)

    # Attention gate.
    o_ref[0] = xT_ref[0] * f


def edge_attention_fwd(params, x, feat, *, compute_dtype=jnp.float32):
    """x: [B, E, out_n] (or [E, out_n]), feat: [B, E, in_n] (or [E, in_n]).

    Each batch element is an independent invocation of the module (its own
    BatchNorm batch statistics), processed as one step of the batch grid axis.
    `compute_dtype=jnp.bfloat16` enables bf16 matmul operands (recommended on
    v6e/v7x at large E); accumulation and the epilogue stay in f32.
    """
    squeeze = (x.ndim == 2)
    if squeeze:
        x, feat = x[None], feat[None]

    B, E, out_n = x.shape
    in_n = feat.shape[-1]
    hid = params["W1T"].shape[0]

    # Lane-dense layout: edge axis E on the 128-wide lane axis.
    xT = jnp.swapaxes(x, -1, -2)        # [B, out_n, E]
    featT = jnp.swapaxes(feat, -1, -2)  # [B, in_n,  E]
    w1t = params["W1T"].astype(compute_dtype)   # [hid, in_n]
    w2t = params["W2T"].astype(compute_dtype)   # [out_n, hid]
    gamma, beta = params["gamma"], params["beta"]  # [hid, 1] each

    wbytes = jnp.dtype(compute_dtype).itemsize
    flops = int(B * E * (2 * hid * in_n + 2 * out_n * hid + 6 * hid + 5 * out_n))
    transcendentals = int(B * hid)  # one rsqrt per hidden channel per graph
    bytes_accessed = int(4 * (2 * xT.size + featT.size + gamma.size + beta.size)
                         + wbytes * (w1t.size + w2t.size))

    outT = pl.pallas_call(
        _edge_attention_kernel,
        out_shape=jax.ShapeDtypeStruct((B, out_n, E), jnp.float32),
        grid_spec=pltpu.PrefetchScalarGridSpec(
            num_scalar_prefetch=0,
            grid=(B,),
            in_specs=[
                pl.BlockSpec((1, out_n, E), lambda b: (b, 0, 0)),   # xT
                pl.BlockSpec((1, in_n, E), lambda b: (b, 0, 0)),    # featT
                pl.BlockSpec((hid, in_n), lambda b: (0, 0)),        # W1T (shared)
                pl.BlockSpec((hid, 1), lambda b: (0, 0)),           # gamma
                pl.BlockSpec((hid, 1), lambda b: (0, 0)),           # beta
                pl.BlockSpec((out_n, hid), lambda b: (0, 0)),       # W2T (shared)
            ],
            out_specs=pl.BlockSpec((1, out_n, E), lambda b: (b, 0, 0)),
        ),
        compiler_params=pltpu.CompilerParams(
            dimension_semantics=("parallel",),      # v7x: shard graphs over 2 TCs
            vmem_limit_bytes=32 * 1024 * 1024,      # explicit, v5e/v7x safe
        ),
        cost_estimate=pl.CostEstimate(
            flops=flops, transcendentals=transcendentals,
            bytes_accessed=bytes_accessed),
    )(xT, featT, w1t, gamma, beta, w2t)

    out = jnp.swapaxes(outT, -1, -2)  # [B, E, out_n]
    return out[0] if squeeze else out


# ----------------------------- parameters / reference -----------------------------


def init_edge_attention(key, in_n, out_n, ratio):
    hid = out_n // ratio
    k1, k2, k3 = jax.random.split(key, 3)
    bnd1 = 1.0 / math.sqrt(in_n)
    bnd2 = 1.0 / math.sqrt(hid)
    W1 = jax.random.uniform(k1, (in_n, hid), jnp.float32, -bnd1, bnd1)
    b1 = jax.random.uniform(k2, (hid,), jnp.float32, -bnd1, bnd1)
    W2 = jax.random.uniform(k3, (hid, out_n), jnp.float32, -bnd2, bnd2)
    return {
        # Weights stored pre-transposed for the lane-dense (E-on-lanes) kernel.
        "W1T": W1.T,                       # [hid, in_n]
        "W2T": W2.T,                       # [out_n, hid]
        # b1 kept only for the faithful reference; the kernel does not need it
        # (exactly cancelled by the training-mode BN mean subtraction).
        "b1": b1,                          # [hid]
        "gamma": jnp.ones((hid, 1), jnp.float32),
        "beta": jnp.zeros((hid, 1), jnp.float32),
    }


def edge_attention_ref(params, x, feat):
    # Pure-JAX reference mirroring the torch module (training-mode BN),
    # applied independently per batch element.
    W1 = params["W1T"].T                   # [in_n, hid]
    W2 = params["W2T"].T                   # [hid, out_n]
    h = feat @ W1 + params["b1"]           # [B, E, hid]
    mean = jnp.mean(h, axis=-2, keepdims=True)
    var = jnp.mean((h - mean) ** 2, axis=-2, keepdims=True)
    h = ((h - mean) * jax.lax.rsqrt(var + EPS)
         * params["gamma"][:, 0] + params["beta"][:, 0])
    h = jnp.maximum(h, 0.0)
    f = h @ W2
    f = jnp.clip(f / 6.0 + 0.5, 0.0, 1.0)
    return x * f


# ---------------------------------- main ----------------------------------

if __name__ == "__main__":
    key = jax.random.PRNGKey(0)
    kp, kx, kf = jax.random.split(key, 3)

    # GFN2-NMR shapes: edge_Attention(in_n=11, out_n=18, ratio=3) -> hidden 6.
    # B=4 graphs of E=256 edges each, batched into one pallas_call so the edge
    # axis is lane-dense and the fixed per-call cost is amortized.
    in_n, out_n, ratio = 11, 18, 3
    B, E = 4, 256

    params = init_edge_attention(kp, in_n, out_n, ratio)
    x = jax.random.normal(kx, (B, E, out_n), jnp.float32)
    feat = jax.random.normal(kf, (B, E, in_n), jnp.float32)

    fwd = jax.jit(lambda xx, ff: edge_attention_fwd(params, xx, ff))
    out = jax.block_until_ready(fwd(x, feat))

    ref = edge_attention_ref(params, x, feat)
    assert out.shape == (B, E, out_n) and out.dtype == jnp.float32
    assert bool(jnp.allclose(out, ref, atol=2e-5, rtol=1e-4)), (
        float(jnp.max(jnp.abs(out - ref))))
    print("KERNEL_OK")
</pallas_src>

<mosaic_0001>
module attributes {stable_mosaic.version = 11 : i64} {
  func.func @_edge_attention_kernel(%arg0: i32, %arg1: memref<1x18x256xf32, #tpu.memory_space<vmem>>, %arg2: memref<1x11x256xf32, #tpu.memory_space<vmem>>, %arg3: memref<6x11xf32, #tpu.memory_space<vmem>>, %arg4: memref<6x1xf32, #tpu.memory_space<vmem>>, %arg5: memref<6x1xf32, #tpu.memory_space<vmem>>, %arg6: memref<18x6xf32, #tpu.memory_space<vmem>>, %arg7: memref<1x18x256xf32, #tpu.memory_space<vmem>>) attributes {dimension_semantics = [#tpu.dimension_semantics<parallel>], iteration_bounds = array<i64: 4>, scalar_prefetch = 0 : i64, scratch_operands = 0 : i64, tpu.core_type = #tpu.core_type<tc>, window_params = [{transform_indices = @transform_0, window_bounds = array<i64: 1, 18, 256>}, {transform_indices = @transform_1, window_bounds = array<i64: 1, 11, 256>}, {pipeline_mode = #tpu.pipeline_mode<synchronous>, transform_indices = @transform_2, window_bounds = array<i64: 6, 11>}, {pipeline_mode = #tpu.pipeline_mode<synchronous>, transform_indices = @transform_3, window_bounds = array<i64: 6, 1>}, {pipeline_mode = #tpu.pipeline_mode<synchronous>, transform_indices = @transform_4, window_bounds = array<i64: 6, 1>}, {pipeline_mode = #tpu.pipeline_mode<synchronous>, transform_indices = @transform_5, window_bounds = array<i64: 18, 6>}, {transform_indices = @transform_6, window_bounds = array<i64: 1, 18, 256>}]} {
    %c0 = arith.constant 0 : index
    %c0_0 = arith.constant 0 : index
    %c0_1 = arith.constant 0 : index
    %0 = vector.load %arg2[%c0, %c0_0, %c0_1] : memref<1x11x256xf32, #tpu.memory_space<vmem>>, vector<1x11x256xf32>
    %1 = vector.shape_cast %0 : vector<1x11x256xf32> to vector<11x256xf32>
    %c0_2 = arith.constant 0 : index
    %c0_3 = arith.constant 0 : index
    %2 = vector.load %arg3[%c0_2, %c0_3] : memref<6x11xf32, #tpu.memory_space<vmem>>, vector<6x11xf32>
    %cst = arith.constant dense<0.000000e+00> : vector<6x256xf32>
    %3 = tpu.matmul %2, %1, %cst {dimension_numbers = #tpu.dot_dimension_numbers<[1], [0], [0], [1], [0, 0, 1, 1], [], []>} : vector<6x11xf32>, vector<11x256xf32>, vector<6x256xf32> -> vector<6x256xf32>
    %cst_4 = arith.constant dense<0.000000e+00> : vector<6xf32>
    %4 = vector.multi_reduction <add>, %3, %cst_4 [1] : vector<6x256xf32> to vector<6xf32>
    %5 = vector.shape_cast %4 : vector<6xf32> to vector<6x1xf32>
    %cst_5 = arith.constant 2.560000e+02 : f32
    %6 = vector.broadcast %cst_5 : f32 to vector<6x1xf32>
    %7 = arith.divf %5, %6 : vector<6x1xf32>
    %8 = vector.broadcast %7 : vector<6x1xf32> to vector<6x256xf32>
    %9 = arith.subf %3, %8 : vector<6x256xf32>
    %10 = vector.broadcast %7 : vector<6x1xf32> to vector<6x256xf32>
    %11 = arith.subf %3, %10 : vector<6x256xf32>
    %12 = arith.mulf %9, %11 : vector<6x256xf32>
    %cst_6 = arith.constant dense<0.000000e+00> : vector<6xf32>
    %13 = vector.multi_reduction <add>, %12, %cst_6 [1] : vector<6x256xf32> to vector<6xf32>
    %14 = vector.shape_cast %13 : vector<6xf32> to vector<6x1xf32>
    %cst_7 = arith.constant 2.560000e+02 : f32
    %15 = vector.broadcast %cst_7 : f32 to vector<6x1xf32>
    %16 = arith.divf %14, %15 : vector<6x1xf32>
    %c0_8 = arith.constant 0 : index
    %c0_9 = arith.constant 0 : index
    %17 = vector.load %arg4[%c0_8, %c0_9] : memref<6x1xf32, #tpu.memory_space<vmem>>, vector<6x1xf32>
    %cst_10 = arith.constant 9.99999974E-6 : f32
    %18 = vector.broadcast %cst_10 : f32 to vector<6x1xf32>
    %19 = arith.addf %16, %18 : vector<6x1xf32>
    %20 = math.rsqrt %19 : vector<6x1xf32>
    %21 = arith.mulf %17, %20 : vector<6x1xf32>
    %c0_11 = arith.constant 0 : index
    %c0_12 = arith.constant 0 : index
    %22 = vector.load %arg5[%c0_11, %c0_12] : memref<6x1xf32, #tpu.memory_space<vmem>>, vector<6x1xf32>
    %23 = arith.mulf %7, %21 : vector<6x1xf32>
    %24 = arith.subf %22, %23 : vector<6x1xf32>
    %25 = vector.broadcast %21 : vector<6x1xf32> to vector<6x256xf32>
    %26 = arith.mulf %3, %25 : vector<6x256xf32>
    %27 = vector.broadcast %24 : vector<6x1xf32> to vector<6x256xf32>
    %28 = arith.addf %26, %27 : vector<6x256xf32>
    %cst_13 = arith.constant 0.000000e+00 : f32
    %29 = vector.broadcast %cst_13 : f32 to vector<6x256xf32>
    %30 = arith.maximumf %28, %29 : vector<6x256xf32>
    %c0_14 = arith.constant 0 : index
    %c0_15 = arith.constant 0 : index
    %31 = vector.load %arg6[%c0_14, %c0_15] : memref<18x6xf32, #tpu.memory_space<vmem>>, vector<18x6xf32>
    %cst_16 = arith.constant dense<0.000000e+00> : vector<18x256xf32>
    %32 = tpu.matmul %31, %30, %cst_16 {dimension_numbers = #tpu.dot_dimension_numbers<[1], [0], [0], [1], [0, 0, 1, 1], [], []>} : vector<18x6xf32>, vector<6x256xf32>, vector<18x256xf32> -> vector<18x256xf32>
    %cst_17 = arith.constant 0.166666672 : f32
    %33 = vector.broadcast %cst_17 : f32 to vector<18x256xf32>
    %34 = arith.mulf %32, %33 : vector<18x256xf32>
    %cst_18 = arith.constant 5.000000e-01 : f32
    %35 = vector.broadcast %cst_18 : f32 to vector<18x256xf32>
    %36 = arith.addf %34, %35 : vector<18x256xf32>
    %cst_19 = arith.constant 0.000000e+00 : f32
    %cst_20 = arith.constant 1.000000e+00 : f32
    %37 = vector.broadcast %cst_19 : f32 to vector<18x256xf32>
    %38 = arith.maximumf %37, %36 : vector<18x256xf32>
    %39 = vector.broadcast %cst_20 : f32 to vector<18x256xf32>
    %40 = arith.minimumf %39, %38 : vector<18x256xf32>
    %c0_21 = arith.constant 0 : index
    %c0_22 = arith.constant 0 : index
    %c0_23 = arith.constant 0 : index
    %41 = vector.load %arg1[%c0_21, %c0_22, %c0_23] : memref<1x18x256xf32, #tpu.memory_space<vmem>>, vector<1x18x256xf32>
    %42 = vector.shape_cast %41 : vector<1x18x256xf32> to vector<18x256xf32>
    %43 = arith.mulf %42, %40 : vector<18x256xf32>
    %c0_24 = arith.constant 0 : index
    %c0_25 = arith.constant 0 : index
    %c0_26 = arith.constant 0 : index
    %44 = vector.load %arg7[%c0_24, %c0_25, %c0_26] : memref<1x18x256xf32, #tpu.memory_space<vmem>>, vector<1x18x256xf32>
    %45 = vector.shape_cast %44 : vector<1x18x256xf32> to vector<18x256xf32>
    %46 = vector.shape_cast %43 : vector<18x256xf32> to vector<1x18x256xf32>
    tpu.vector_store %arg7[%c0_24, %c0_25, %c0_26], %46 {strides = array<i32>} : memref<1x18x256xf32, #tpu.memory_space<vmem>>, vector<1x18x256xf32>,
    return
  }
  func.func @transform_0(%arg0: i32) -> (i32, i32, i32) {
    %c0_i32 = arith.constant 0 : i32
    %c0_i32_0 = arith.constant 0 : i32
    %c0_i32_1 = arith.constant 0 : i32
    return %arg0, %c0_i32, %c0_i32_0 : i32, i32, i32
  }
  func.func @transform_1(%arg0: i32) -> (i32, i32, i32) {
    %c0_i32 = arith.constant 0 : i32
    %c0_i32_0 = arith.constant 0 : i32
    %c0_i32_1 = arith.constant 0 : i32
    return %arg0, %c0_i32, %c0_i32_0 : i32, i32, i32
  }
  func.func @transform_2(%arg0: i32) -> (i32, i32) {
    %c0_i32 = arith.constant 0 : i32
    %c0_i32_0 = arith.constant 0 : i32
    %c0_i32_1 = arith.constant 0 : i32
    return %c0_i32, %c0_i32_0 : i32, i32
  }
  func.func @transform_3(%arg0: i32) -> (i32, i32) {
    %c0_i32 = arith.constant 0 : i32
    %c0_i32_0 = arith.constant 0 : i32
    %c0_i32_1 = arith.constant 0 : i32
    return %c0_i32, %c0_i32_0 : i32, i32
  }
  func.func @transform_4(%arg0: i32) -> (i32, i32) {
    %c0_i32 = arith.constant 0 : i32
    %c0_i32_0 = arith.constant 0 : i32
    %c0_i32_1 = arith.constant 0 : i32
    return %c0_i32, %c0_i32_0 : i32, i32
  }
  func.func @transform_5(%arg0: i32) -> (i32, i32) {
    %c0_i32 = arith.constant 0 : i32
    %c0_i32_0 = arith.constant 0 : i32
    %c0_i32_1 = arith.constant 0 : i32
    return %c0_i32, %c0_i32_0 : i32, i32
  }
  func.func @transform_6(%arg0: i32) -> (i32, i32, i32) {
    %c0_i32 = arith.constant 0 : i32
    %c0_i32_0 = arith.constant 0 : i32
    %c0_i32_1 = arith.constant 0 : i32
    return %arg0, %c0_i32, %c0_i32_0 : i32, i32, i32
  }
}

</mosaic_0001>

<llo_original>
// kernel: _lambda_.1
$region0: #{_lambda_.1}
  #allocation0 [shape = 'u32[]', space=smem, size = 0x4, offset = 0x4, fixed_abs, tag = 'smem constant byte address 0x4 - core index']
  #allocation1 [shape = 'u32[144,128]{1,0:T(1,128)}', space=vmem, size = 0x12000, scoped, tag = 'internal scratch']
  %s0 = inlined_call_operand.vmem [shape: f32[4,18,256], index: 0, kind: input, shape index: {}]
  %s1 = inlined_call_operand.vmem [shape: f32[4,11,256], index: 1, kind: input, shape index: {}]
  %s2 = inlined_call_operand.vmem [shape: f32[6,11], index: 2, kind: input, shape index: {}]
  %s3 = inlined_call_operand.vmem [shape: f32[6,1], index: 3, kind: input, shape index: {}]
  %s4 = inlined_call_operand.vmem [shape: f32[6,1], index: 4, kind: input, shape index: {}]
  %s5 = inlined_call_operand.vmem [shape: f32[18,6], index: 5, kind: input, shape index: {}]
  %s6 = inlined_call_operand.vmem [shape: f32[4,18,256], index: 6, kind: output, shape index: {}]
  %s7 = sld [smem:[#allocation0]]
  $region57: #{_lambda_.1} parent=0
    _
  %s9 = ssub.s32 1, %s7
  %s10 = scalar_select 0, %s9, %s7
  loop: start=0, step=1, limit=6
  $region2: #{_lambda_.1} parent=0 // loop_pre_header
    _
  $region3: #{_lambda_.1} parent=0 // loop_header
    %s12 = sphi 0, %s16
    %p13 = scmp.ge.s32.totalorder %s12, 6
    %s22 = sphi 0, %s24
    %s25 = sphi 0, %s22
    %s26 = sphi 0, %s25
    %s42 = sphi 0, %s26
    %s48 = sphi 0, %s50
    %s51 = sphi 0, %s48
    %s52 = sphi 0, %s51
    %s68 = sphi 0, %s52
    %s72 = sphi 0, %s72
    %s74 = sphi 0, %s72
    %s75 = sphi 0, %s74
    %s89 = sphi 0, %s75
    %s93 = sphi 0, %s93
    %s95 = sphi 0, %s93
    %s96 = sphi 0, %s95
    %s110 = sphi 0, %s96
    %s114 = sphi 0, %s114
    %s116 = sphi 0, %s114
    %s117 = sphi 0, %s116
    %s131 = sphi 0, %s117
    %s135 = sphi 0, %s135
    %s137 = sphi 0, %s135
    %s138 = sphi 0, %s137
    %s152 = sphi 0, %s138
    %s158 = sphi 0, %s160
    %s161 = sphi 0, %s158
    %s162 = sphi 0, %s161
    %s178 = sphi 0, %s162
  $region4: #{_lambda_.1} parent=0 // loop_header_branch
    %15 = sbr.rel (%p13) target = $region8
  $region5: #{_lambda_.1} parent=0 // loop_body
    %s17 = ssub.s32 %s12, 1
    %s18 = ssub.s32 %s12, 2
    %s19 = sadd.s32 %s12, 1
    %s20 = ssub.s32 %s12, %s19
    %p21 = scmp.eq.s32.totalorder %s20, 0
    %s23 = sadd.s32 %s22, 1
    %s24 = scalar_select %p21, %s22, %s23
    %p27 = pneg %p21
    %p28 = scmp.eq.s32.totalorder %s12, 3
    %p29 = por %p27, %p28
    %p30 = scmp.ne.s32.totalorder %s22, %s25
    %p31 = scmp.eq.s32.totalorder %s12, 0
    %p32 = por %p30, %p31
    %p33 = scmp.ne.s32.totalorder %s22, %s25
    %p34 = scmp.eq.s32.totalorder %s17, 3
    %p35 = por %p33, %p34
    %p36 = scmp.ne.s32.totalorder %s25, %s26
    %p37 = scmp.eq.s32.totalorder %s17, 0
    %p38 = por %p36, %p37
    %p39 = scmp.ne.s32.totalorder %s25, %s26
    %p40 = scmp.eq.s32.totalorder %s18, 3
    %p41 = por %p39, %p40
    %p43 = scmp.ne.s32.totalorder %s26, %s42
    %p44 = scmp.eq.s32.totalorder %s18, 0
    %p45 = por %p43, %p44
    %s46 = ssub.s32 %s12, %s19
    %p47 = scmp.eq.s32.totalorder %s46, 0
    %s49 = sadd.s32 %s48, 1
    %s50 = scalar_select %p47, %s48, %s49
    %p53 = pneg %p47
    %p54 = scmp.eq.s32.totalorder %s12, 3
    %p55 = por %p53, %p54
    %p56 = scmp.ne.s32.totalorder %s48, %s51
    %p57 = scmp.eq.s32.totalorder %s12, 0
    %p58 = por %p56, %p57
    %p59 = scmp.ne.s32.totalorder %s48, %s51
    %p60 = scmp.eq.s32.totalorder %s17, 3
    %p61 = por %p59, %p60
    %p62 = scmp.ne.s32.totalorder %s51, %s52
    %p63 = scmp.eq.s32.totalorder %s17, 0
    %p64 = por %p62, %p63
    %p65 = scmp.ne.s32.totalorder %s51, %s52
    %p66 = scmp.eq.s32.totalorder %s18, 3
    %p67 = por %p65, %p66
    %p69 = scmp.ne.s32.totalorder %s52, %s68
    %p70 = scmp.eq.s32.totalorder %s18, 0
    %p71 = por %p69, %p70
    %s73 = sadd.s32 %s72, 1
    %p76 = scmp.eq.s32.totalorder %s12, 3
    %p77 = scmp.ne.s32.totalorder %s72, %s74
    %p78 = scmp.eq.s32.totalorder %s12, 0
    %p79 = por %p77, %p78
    %p80 = scmp.ne.s32.totalorder %s72, %s74
    %p81 = scmp.eq.s32.totalorder %s17, 3
    %p82 = por %p80, %p81
    %p83 = scmp.ne.s32.totalorder %s74, %s75
    %p84 = scmp.eq.s32.totalorder %s17, 0
    %p85 = por %p83, %p84
    %p86 = scmp.ne.s32.totalorder %s74, %s75
    %p87 = scmp.eq.s32.totalorder %s18, 3
    %p88 = por %p86, %p87
    %p90 = scmp.ne.s32.totalorder %s75, %s89
    %p91 = scmp.eq.s32.totalorder %s18, 0
    %p92 = por %p90, %p91
    %s94 = sadd.s32 %s93, 1
    %p97 = scmp.eq.s32.totalorder %s12, 3
    %p98 = scmp.ne.s32.totalorder %s93, %s95
    %p99 = scmp.eq.s32.totalorder %s12, 0
    %p100 = por %p98, %p99
    %p101 = scmp.ne.s32.totalorder %s93, %s95
    %p102 = scmp.eq.s32.totalorder %s17, 3
    %p103 = por %p101, %p102
    %p104 = scmp.ne.s32.totalorder %s95, %s96
    %p105 = scmp.eq.s32.totalorder %s17, 0
    %p106 = por %p104, %p105
    %p107 = scmp.ne.s32.totalorder %s95, %s96
    %p108 = scmp.eq.s32.totalorder %s18, 3
    %p109 = por %p107, %p108
    %p111 = scmp.ne.s32.totalorder %s96, %s110
    %p112 = scmp.eq.s32.totalorder %s18, 0
    %p113 = por %p111, %p112
    %s115 = sadd.s32 %s114, 1
    %p118 = scmp.eq.s32.totalorder %s12, 3
    %p119 = scmp.ne.s32.totalorder %s114, %s116
    %p120 = scmp.eq.s32.totalorder %s12, 0
    %p121 = por %p119, %p120
    %p122 = scmp.ne.s32.totalorder %s114, %s116
    %p123 = scmp.eq.s32.totalorder %s17, 3
    %p124 = por %p122, %p123
    %p125 = scmp.ne.s32.totalorder %s116, %s117
    %p126 = scmp.eq.s32.totalorder %s17, 0
    %p127 = por %p125, %p126
    %p128 = scmp.ne.s32.totalorder %s116, %s117
    %p129 = scmp.eq.s32.totalorder %s18, 3
    %p130 = por %p128, %p129
    %p132 = scmp.ne.s32.totalorder %s117, %s131
    %p133 = scmp.eq.s32.totalorder %s18, 0
    %p134 = por %p132, %p133
    %s136 = sadd.s32 %s135, 1
    %p139 = scmp.eq.s32.totalorder %s12, 3
    %p140 = scmp.ne.s32.totalorder %s135, %s137
    %p141 = scmp.eq.s32.totalorder %s12, 0
    %p142 = por %p140, %p141
    %p143 = scmp.ne.s32.totalorder %s135, %s137
    %p144 = scmp.eq.s32.totalorder %s17, 3
    %p145 = por %p143, %p144
    %p146 = scmp.ne.s32.totalorder %s137, %s138
    %p147 = scmp.eq.s32.totalorder %s17, 0
    %p148 = por %p146, %p147
    %p149 = scmp.ne.s32.totalorder %s137, %s138
    %p150 = scmp.eq.s32.totalorder %s18, 3
    %p151 = por %p149, %p150
    %p153 = scmp.ne.s32.totalorder %s138, %s152
    %p154 = scmp.eq.s32.totalorder %s18, 0
    %p155 = por %p153, %p154
    %s156 = ssub.s32 %s12, %s19
    %p157 = scmp.eq.s32.totalorder %s156, 0
    %s159 = sadd.s32 %s158, 1
    %s160 = scalar_select %p157, %s158, %s159
    %p163 = pneg %p157
    %p164 = scmp.eq.s32.totalorder %s12, 3
    %p165 = por %p163, %p164
    %p166 = scmp.ne.s32.totalorder %s158, %s161
    %p167 = scmp.eq.s32.totalorder %s12, 0
    %p168 = por %p166, %p167
    %p169 = scmp.ne.s32.totalorder %s158, %s161
    %p170 = scmp.eq.s32.totalorder %s17, 3
    %p171 = por %p169, %p170
    %p172 = scmp.ne.s32.totalorder %s161, %s162
    %p173 = scmp.eq.s32.totalorder %s17, 0
    %p174 = por %p172, %p173
    %p175 = scmp.ne.s32.totalorder %s161, %s162
    %p176 = scmp.eq.s32.totalorder %s18, 3
    %p177 = por %p175, %p176
    %p179 = scmp.ne.s32.totalorder %s162, %s178
    %p180 = scmp.eq.s32.totalorder %s18, 0
    %p181 = por %p179, %p180
    %p182 = scmp.le.s32.totalorder 1, %s12
    %p183 = scmp.lt.s32.totalorder %s12, 5
    %p184 = pnand %p182, %p183
    %p185 = pneg %p184
    // Predicated region
    $region9: #{_lambda_.1} parent=5 // pred_check
      _
    $region10: #{_lambda_.1} parent=5 // pred_check_branch
      %187 = sbr.rel (%p184) target = $region12
    $region11: #{_lambda_.1} parent=5 // pred_region
      %s188 = ssub.s32 %s12, 1
      // Predicated region
      $region13: #{_lambda_.1} parent=11 // pred_check
        %p189 = pneg %p85
      $region14: #{_lambda_.1} parent=11 // pred_check_branch
        %191 = sbr.rel (%p189) target = $region16
      $region15: #{_lambda_.1} parent=11 // pred_region
        _
      $region16: #{_lambda_.1} parent=11 // pred_fallthru
        _
      // Predicated region
      $region17: #{_lambda_.1} parent=11 // pred_check
        %p192 = pneg %p106
      $region18: #{_lambda_.1} parent=11 // pred_check_branch
        %194 = sbr.rel (%p192) target = $region20
      $region19: #{_lambda_.1} parent=11 // pred_region
        _
      $region20: #{_lambda_.1} parent=11 // pred_fallthru
        _
      // Predicated region
      $region21: #{_lambda_.1} parent=11 // pred_check
        %p195 = pneg %p127
      $region22: #{_lambda_.1} parent=11 // pred_check_branch
        %197 = sbr.rel (%p195) target = $region24
      $region23: #{_lambda_.1} parent=11 // pred_region
        _
      $region24: #{_lambda_.1} parent=11 // pred_fallthru
        _
      // Predicated region
      $region25: #{_lambda_.1} parent=11 // pred_check
        %p198 = pneg %p148
      $region26: #{_lambda_.1} parent=11 // pred_check_branch
        %200 = sbr.rel (%p198) target = $region28
      $region27: #{_lambda_.1} parent=11 // pred_region
        _
      $region28: #{_lambda_.1} parent=11 // pred_fallthru
        _
    $region12: #{_lambda_.1} parent=5 // pred_fallthru
      _
    %p201 = scmp.lt.s32.totalorder %s12, 4
    // Predicated region
    $region29: #{_lambda_.1} parent=5 // pred_check
      %p202 = pneg %p201
    $region30: #{_lambda_.1} parent=5 // pred_check_branch
      %204 = sbr.rel (%p202) target = $region32
    $region31: #{_lambda_.1} parent=5 // pred_region
      // Predicated region
      $region33: #{_lambda_.1} parent=31 // pred_check
        %p205 = pneg %p32
      $region34: #{_lambda_.1} parent=31 // pred_check_branch
        %207 = sbr.rel (%p205) target = $region36
      $region35: #{_lambda_.1} parent=31 // pred_region
        %p208 = scmp.lt.s32.totalorder %s12, 3
        %s209 = scalar_select %p208, %s12, 3
        %s210 = smul.addr %s209, 6
        %s211 = smul.addr %s210, 8
        %s212 = scalar_lea.vmem %s0, %s211
      $region36: #{_lambda_.1} parent=31 // pred_fallthru
        _
      // Predicated region
      $region37: #{_lambda_.1} parent=31 // pred_check
        %p213 = pneg %p58
      $region38: #{_lambda_.1} parent=31 // pred_check_branch
        %215 = sbr.rel (%p213) target = $region40
      $region39: #{_lambda_.1} parent=31 // pred_region
        %p216 = scmp.lt.s32.totalorder %s12, 3
        %s217 = scalar_select %p216, %s12, 3
        %s218 = smul.addr %s217, 4
        %s219 = smul.addr %s218, 8
        %s220 = scalar_lea.vmem %s1, %s219
      $region40: #{_lambda_.1} parent=31 // pred_fallthru
        _
    $region32: #{_lambda_.1} parent=5 // pred_fallthru
      _
    %p221 = scmp.le.s32.totalorder 1, %s12
    %p222 = scmp.lt.s32.totalorder %s12, 5
    %p223 = pnand %p221, %p222
    %p224 = pneg %p223
    // Predicated region
    $region41: #{_lambda_.1} parent=5 // pred_check
      _
    $region42: #{_lambda_.1} parent=5 // pred_check_branch
      %226 = sbr.rel (%p223) target = $region44
    $region43: #{_lambda_.1} parent=5 // pred_region
      %s227 = ssub.s32 %s12, 1
      %p228 = scmp.lt.s32.totalorder %s17, 3
      %s229 = scalar_select %p228, %s17, 3
      %s230 = smul.addr %s229, 6
      %s231 = smul.addr %s230, 8
      %s232 = scalar_lea.vmem %s0, %s231
      %p233 = pneg %p38
      %p234 = pneg %p35
      %p235 = scmp.lt.s32.totalorder %s17, 3
      %s236 = scalar_select %p235, %s17, 3
      %s237 = smul.addr %s236, 4
      %s238 = smul.addr %s237, 8
      %s239 = scalar_lea.vmem %s1, %s238
      %p240 = pneg %p64
      %p241 = pneg %p61
      %p242 = pneg %p85
      %p243 = pneg %p82
      %p244 = pneg %p106
      %p245 = pneg %p103
      %p246 = pneg %p127
      %p247 = pneg %p124
      %p248 = pneg %p148
      %p249 = pneg %p145
      %p250 = pneg %p174
      %p251 = pneg %p171
      %p252 = scmp.lt.s32.totalorder %s17, 3
      %s253 = scalar_select %p252, %s17, 3
      %s254 = smul.addr %s253, 6
      %s255 = smul.addr %s254, 8
      %s256 = scalar_lea.vmem %s6, %s255
      %p257 = scmp.lt.s32.totalorder %s17, 3
      %s258 = scalar_select %p257, %s17, 3
      %s259 = smul.addr %s258, 6
      %s260 = smul.addr %s259, 8
      %s261 = scalar_lea.vmem %s0, %s260
      %p262 = scmp.lt.s32.totalorder %s17, 3
      %s263 = scalar_select %p262, %s17, 3
      %s264 = smul.addr %s263, 4
      %s265 = smul.addr %s264, 8
      %s266 = scalar_lea.vmem %s1, %s265
      %p267 = scmp.lt.s32.totalorder %s17, 3
      %s268 = scalar_select %p267, %s17, 3
      %s269 = smul.addr %s268, 6
      %s270 = smul.addr %s269, 8
      %s271 = scalar_lea.vmem %s6, %s270
      %v272 = vld [vmem:[%s266] sm:$0xff]
      %v273 = vld [vmem:[%s266 + $0x8] sm:$0xff]
      %v274 = vld [vmem:[%s266 + $0x10] sm:$0x7]
      %v275 = vld [vmem:[%s266 + $0x18] sm:$0x7]
      %v276 = vld [vmem:[%s2] sm:$0x3f]
      %vm277 = vcmask 89088
      %v279 = vsel %vm277, %v276, 0
      %vm281 = vcmask 1042432
      %v283 = vsel %vm281, %v274, 0
      %v286 = vsel %vm281, %v275, 0
      %288 = vmatprep.subr.mxu0 %v273
      %289 = vmatpush1.msra.mxu0 %v272
      %290 = vmatprep.subr.mxu0 %v286
      %291 = vmatpush1.msra.mxu0 %v283
      %292 = vmatprep.subr.mxu0 0.0
      %293 = vmatpush1.msra.mxu0 0.0
      %294 = vmatprep.subr.mxu0 0.0
      %295 = vmatpush1.msra.mxu0 0.0
      %296 = vmatprep.subr.mxu0 0.0
      %297 = vmatpush1.msra.mxu0 0.0
      %298 = vmatprep.subr.mxu0 0.0
      %299 = vmatpush1.msra.mxu0 0.0
      %300 = vmatprep.subr.mxu0 0.0
      %301 = vmatpush1.msra.mxu0 0.0
      %302 = vmatprep.subr.mxu0 0.0
      %303 = vmatpush1.msra.mxu0 0.0
      %304 = vmatprep.subr.mxu0 0.0
      %305 = vmatpush1.msra.mxu0 0.0
      %306 = vmatprep.subr.mxu0 0.0
      %307 = vmatpush1.msra.mxu0 0.0
      %308 = vmatprep.subr.mxu0 0.0
      %309 = vmatpush1.msra.mxu0 0.0
      %310 = vmatprep.subr.mxu0 0.0
      %311 = vmatpush1.msra.mxu0 0.0
      %312 = vmatprep.subr.mxu0 0.0
      %313 = vmatpush1.msra.mxu0 0.0
      %314 = vmatprep.subr.mxu0 0.0
      %315 = vmatpush1.msra.mxu0 0.0
      %316 = vmatprep.subr.mxu0 0.0
      %317 = vmatpush1.msra.mxu0 0.0
      %318 = vmatprep.subr.mxu0 0.0
      %319 = vmatpush1.msra.mxu0 0.0
      %320 = vmatprep.subr.mxu0 0.0
      %321 = vmatpush1.msra.mxu0 0.0
      %322 = vmatprep.subr.mxu0 0.0
      %323 = vmatpush1.msra.mxu0 0.0
      %324 = vmatprep.subr.mxu0 0.0
      %325 = vmatpush1.msra.mxu0 0.0
      %326 = vmatprep.subr.mxu0 0.0
      %327 = vmatpush1.msra.mxu0 0.0
      %328 = vmatprep.subr.mxu0 0.0
      %329 = vmatpush1.msra.mxu0 0.0
      %330 = vmatprep.subr.mxu0 0.0
      %331 = vmatpush1.msra.mxu0 0.0
      %332 = vmatprep.subr.mxu0 0.0
      %333 = vmatpush1.msra.mxu0 0.0
      %334 = vmatprep.subr.mxu0 0.0
      %335 = vmatpush1.msra.mxu0 0.0
      %336 = vmatprep.subr.mxu0 0.0
      %337 = vmatpush1.msra.mxu0 0.0
      %338 = vmatprep.subr.mxu0 0.0
      %339 = vmatpush1.msra.mxu0 0.0
      %340 = vmatprep.subr.mxu0 0.0
      %341 = vmatpush1.msra.mxu0 0.0
      %342 = vmatprep.subr.mxu0 0.0
      %343 = vmatpush1.msra.mxu0 0.0
      %344 = vmatprep.subr.mxu0 0.0
      %345 = vmatpush1.msra.mxu0 0.0
      %346 = vmatprep.subr.mxu0 0.0
      %347 = vmatpush1.msra.mxu0 0.0
      %348 = vmatprep.subr.mxu0 0.0
      %349 = vmatpush1.msra.mxu0 0.0
      %350 = vmatprep.subr.mxu0 0.0
      %351 = vmatpush1.msra.mxu0 0.0
      %352 = vmatprep.mubr.f32.mxu0 0.0
      %353 = vmatmul.mubr.f32.gmra.mrb[0].mxu0 %v279
      %v354 = vpop.f32.mrb[0].mxu0
      %v355 = vadd.f32 0.0, %v354
      %v356 = vpop.f32.mrb[0].mxu0
      %v357 = vadd.f32 0.0, %v356
      %358 = vdwg.mxu0
      %vm359 = vcmask 1045504
      %v360 = vsel %vm359, %v355, 0.0
      %v361 = vsel %vm359, %v357, 0.0
      %v362 = vadd.f32 %v360, %v361
      %363 = vadd.xlane.f32.xlu0 %v362
      %v364 = vpop.xlane.xlu0 %363
      %v365 = vrcp.pop 256.0
      %v366 = vmul.f32 %v364, %v365
      %v367 = vsub.f32 %v355, %v366
      %v368 = vsub.f32 %v357, %v366
      %v369 = vmul.f32 %v367, %v367
      %v370 = vmul.f32 %v368, %v368
      %v371 = vsel %vm359, %v369, 0.0
      %v372 = vsel %vm359, %v370, 0.0
      %v373 = vadd.f32 %v371, %v372
      %374 = vadd.xlane.f32.xlu0 %v373
      %v375 = vpop.xlane.xlu0 %374
      %v376 = vmul.f32 %v375, %v365
      %v377 = vld [vmem:[%s3] sm:$0x3f]
      %v378 = vadd.f32 %v376, 1e-05
      %v379 = vrsqrt.pop %v378
      %v380 = vmul.f32 %v377, %v379
      %v381 = vld [vmem:[%s4] sm:$0x3f]
      %v382 = vmul.f32 %v366, %v380
      %v383 = vsub.f32 %v381, %v382
      %385 = vset.pattern.permute.xlu0 0
      %386 = vperm.xlu0 %385, %v380
      %v387 = vpop.permute.xlu0 %386
      %v389 = vmul.f32 %v355, %v387
      %v390 = vmul.f32 %v357, %v387
      %392 = vset.pattern.permute.xlu0 0
      %393 = vperm.xlu0 %392, %v383
      %v394 = vpop.permute.xlu0 %393
      %v396 = vadd.f32 %v389, %v394
      %v397 = vadd.f32 %v390, %v394
      %v398 = vmax.f32 %v396, 0.0
      %v399 = vmax.f32 %v397, 0.0
      %v400 = vld [vmem:[%s5] sm:$0xff]
      %v401 = vld [vmem:[%s5 + $0x8] sm:$0xff]
      %v402 = vld [vmem:[%s5 + $0x10] sm:$0x3]
      %vm403 = vcmask 48128
      %v405 = vsel %vm403, %v400, 0
      %v408 = vsel %vm403, %v401, 0
      %v411 = vsel %vm403, %v402, 0
      %v414 = vsel %vm359, %v398, 0
      %v417 = vsel %vm359, %v399, 0
      %419 = vmatprep.subr.mxu0 %v417
      %420 = vmatpush1.msra.mxu0 %v414
      %421 = vmatprep.subr.mxu0 0.0
      %422 = vmatpush1.msra.mxu0 0.0
      %423 = vmatprep.subr.mxu0 0.0
      %424 = vmatpush1.msra.mxu0 0.0
      %425 = vmatprep.subr.mxu0 0.0
      %426 = vmatpush1.msra.mxu0 0.0
      %427 = vmatprep.subr.mxu0 0.0
      %428 = vmatpush1.msra.mxu0 0.0
      %429 = vmatprep.subr.mxu0 0.0
      %430 = vmatpush1.msra.mxu0 0.0
      %431 = vmatprep.subr.mxu0 0.0
      %432 = vmatpush1.msra.mxu0 0.0
      %433 = vmatprep.subr.mxu0 0.0
      %434 = vmatpush1.msra.mxu0 0.0
      %435 = vmatprep.subr.mxu0 0.0
      %436 = vmatpush1.msra.mxu0 0.0
      %437 = vmatprep.subr.mxu0 0.0
      %438 = vmatpush1.msra.mxu0 0.0
      %439 = vmatprep.subr.mxu0 0.0
      %440 = vmatpush1.msra.mxu0 0.0
      %441 = vmatprep.subr.mxu0 0.0
      %442 = vmatpush1.msra.mxu0 0.0
      %443 = vmatprep.subr.mxu0 0.0
      %444 = vmatpush1.msra.mxu0 0.0
      %445 = vmatprep.subr.mxu0 0.0
      %446 = vmatpush1.msra.mxu0 0.0
      %447 = vmatprep.subr.mxu0 0.0
      %448 = vmatpush1.msra.mxu0 0.0
      %449 = vmatprep.subr.mxu0 0.0
      %450 = vmatpush1.msra.mxu0 0.0
      %451 = vmatprep.subr.mxu0 0.0
      %452 = vmatpush1.msra.mxu0 0.0
      %453 = vmatprep.subr.mxu0 0.0
      %454 = vmatpush1.msra.mxu0 0.0
      %455 = vmatprep.subr.mxu0 0.0
      %456 = vmatpush1.msra.mxu0 0.0
      %457 = vmatprep.subr.mxu0 0.0
      %458 = vmatpush1.msra.mxu0 0.0
      %459 = vmatprep.subr.mxu0 0.0
      %460 = vmatpush1.msra.mxu0 0.0
      %461 = vmatprep.subr.mxu0 0.0
      %462 = vmatpush1.msra.mxu0 0.0
      %463 = vmatprep.subr.mxu0 0.0
      %464 = vmatpush1.msra.mxu0 0.0
      %465 = vmatprep.subr.mxu0 0.0
      %466 = vmatpush1.msra.mxu0 0.0
      %467 = vmatprep.subr.mxu0 0.0
      %468 = vmatpush1.msra.mxu0 0.0
      %469 = vmatprep.subr.mxu0 0.0
      %470 = vmatpush1.msra.mxu0 0.0
      %471 = vmatprep.subr.mxu0 0.0
      %472 = vmatpush1.msra.mxu0 0.0
      %473 = vmatprep.subr.mxu0 0.0
      %474 = vmatpush1.msra.mxu0 0.0
      %475 = vmatprep.subr.mxu0 0.0
      %476 = vmatpush1.msra.mxu0 0.0
      %477 = vmatprep.subr.mxu0 0.0
      %478 = vmatpush1.msra.mxu0 0.0
      %479 = vmatprep.subr.mxu0 0.0
      %480 = vmatpush1.msra.mxu0 0.0
      %481 = vmatprep.subr.mxu0 0.0
      %482 = vmatpush1.msra.mxu0 0.0
      %483 = vmatprep.mubr.f32.mxu0 0.0
      %484 = vmatmul.mubr.f32.gmra.mrb[0].mxu0 %v405
      %v485 = vpop.f32.mrb[0].mxu0
      %v486 = vadd.f32 0.0, %v485
      %v487 = vpop.f32.mrb[0].mxu0
      %v488 = vadd.f32 0.0, %v487
      %489 = vmatprep.mubr.f32.mxu0 0.0
      %490 = vmatmul.mubr.f32.gmra.mrb[0].mxu0 %v408
      %v491 = vpop.f32.mrb[0].mxu0
      %v492 = vadd.f32 0.0, %v491
      %v493 = vpop.f32.mrb[0].mxu0
      %v494 = vadd.f32 0.0, %v493
      %495 = vmatprep.mubr.f32.mxu0 0.0
      %496 = vmatmul.mubr.f32.gmra.mrb[0].mxu0 %v411
      %v497 = vpop.f32.mrb[0].mxu0
      %v498 = vadd.f32 0.0, %v497
      %v499 = vpop.f32.mrb[0].mxu0
      %v500 = vadd.f32 0.0, %v499
      %501 = vdwg.mxu0
      %v502 = vmul.f32 %v486, 0.16666667
      %v503 = vmul.f32 %v488, 0.16666667
      %v504 = vmul.f32 %v492, 0.16666667
      %v505 = vmul.f32 %v494, 0.16666667
      %v506 = vmul.f32 %v498, 0.16666667
      %v507 = vmul.f32 %v500, 0.16666667
      %v508 = vadd.f32 %v502, 0.5
      %v509 = vadd.f32 %v503, 0.5
      %v510 = vadd.f32 %v504, 0.5
      %v511 = vadd.f32 %v505, 0.5
      %v512 = vadd.f32 %v506, 0.5
      %v513 = vadd.f32 %v507, 0.5
      %v514 = vmax.f32 %v508, 0.0
      %v515 = vmax.f32 %v509, 0.0
      %v516 = vmax.f32 %v510, 0.0
      %v517 = vmax.f32 %v511, 0.0
      %v518 = vmax.f32 %v512, 0.0
      %v519 = vmax.f32 %v513, 0.0
      %v520 = vmin.f32 %v514, 1.0
      %v521 = vmin.f32 %v515, 1.0
      %v522 = vmin.f32 %v516, 1.0
      %v523 = vmin.f32 %v517, 1.0
      %v524 = vmin.f32 %v518, 1.0
      %v525 = vmin.f32 %v519, 1.0
      %v526 = vld [vmem:[%s261] sm:$0xff]
      %v527 = vld [vmem:[%s261 + $0x8] sm:$0xff]
      %v528 = vld [vmem:[%s261 + $0x10] sm:$0xff]
      %v529 = vld [vmem:[%s261 + $0x18] sm:$0xff]
      %v530 = vld [vmem:[%s261 + $0x20] sm:$0x3]
      %v531 = vld [vmem:[%s261 + $0x28] sm:$0x3]
      %v532 = vmul.f32 %v526, %v520
      %v533 = vmul.f32 %v527, %v521
      %v534 = vmul.f32 %v528, %v522
      %v535 = vmul.f32 %v529, %v523
      %v536 = vmul.f32 %v530, %v524
      %v537 = vmul.f32 %v531, %v525
      %538 = vst [vmem:[%s271] sm:$0xff] %v532
      %539 = vst [vmem:[%s271 + $0x8] sm:$0xff] %v533
      %540 = vst [vmem:[%s271 + $0x10] sm:$0xff] %v534
      %541 = vst [vmem:[%s271 + $0x18] sm:$0xff] %v535
      %542 = vst [vmem:[%s271 + $0x20] sm:$0x3] %v536
      %543 = vst [vmem:[%s271 + $0x28] sm:$0x3] %v537
      %p544 = scmp.lt.s32.totalorder %s17, 3
      %s545 = scalar_select %p544, %s17, 3
      %s546 = smul.addr %s545, 6
      %s547 = smul.addr %s546, 8
      %s548 = scalar_lea.vmem %s6, %s547
      // Predicated region
      $region45: #{_lambda_.1} parent=43 // pred_check
        %p549 = pneg %p171
      $region46: #{_lambda_.1} parent=43 // pred_check_branch
        %551 = sbr.rel (%p549) target = $region48
      $region47: #{_lambda_.1} parent=43 // pred_region
        _
      $region48: #{_lambda_.1} parent=43 // pred_fallthru
        _
    $region44: #{_lambda_.1} parent=5 // pred_fallthru
      _
    %p552 = scmp.le.s32.totalorder 2, %s12
    // Predicated region
    $region49: #{_lambda_.1} parent=5 // pred_check
      %p553 = pneg %p552
    $region50: #{_lambda_.1} parent=5 // pred_check_branch
      %555 = sbr.rel (%p553) target = $region52
    $region51: #{_lambda_.1} parent=5 // pred_region
      %s556 = ssub.s32 %s12, 2
      // Predicated region
      $region53: #{_lambda_.1} parent=51 // pred_check
        %p557 = pneg %p177
      $region54: #{_lambda_.1} parent=51 // pred_check_branch
        %559 = sbr.rel (%p557) target = $region56
      $region55: #{_lambda_.1} parent=51 // pred_region
        %p560 = scmp.lt.s32.totalorder %s18, 3
        %s561 = scalar_select %p560, %s18, 3
        %s562 = smul.addr %s561, 6
        %s563 = smul.addr %s562, 8
        %s564 = scalar_lea.vmem %s6, %s563
      $region56: #{_lambda_.1} parent=51 // pred_fallthru
        _
    $region52: #{_lambda_.1} parent=5 // pred_fallthru
      _
  $region6: #{_lambda_.1} parent=0 // loop_footer
    %s16 = sadd.s32 1, %s12
  $region7: #{_lambda_.1} parent=0 // loop_footer_branch
    %11 = sbr.rel target = $region3
  $region8: #{_lambda_.1} parent=0 // loop_exit
    _

</llo_original>
